<compile_context>
chip_gen: v7x
topology: tpu7x:2x2x1
jax: 0.10.0
libtpu: 0.0.40
codegen_flags: <defaults>
</compile_context>

<pallas_src>
import math
import functools

import jax
import jax.numpy as jnp
from jax import lax
from jax.experimental import pallas as pl
from jax.experimental.pallas import tpu as pltpu


VMEM_LIMIT_BYTES = 48 * 1024 * 1024   # > v5e(16)/v6e(32) scoped defaults, < v7x 64 MiB phys


# --------------------------------------------------------------------------- #
# tiling helpers
# --------------------------------------------------------------------------- #

def _tile_rows(dim, targets=(512, 256, 128)):
    """Row (sublane) tile: prefer 512/256/128, else largest 8-multiple divisor."""
    for t in targets:
        if dim % t == 0:
            return t
    start = min(512, dim)
    start -= start % 8
    for t in range(start, 0, -8):
        if dim % t == 0:
            return t
    return dim


def _tile_lanes(dim, targets=(512, 256, 128)):
    """Lane tile: must stay a 128-multiple, else use the full dimension."""
    for t in targets:
        if dim % t == 0:
            return t
    return dim


# --------------------------------------------------------------------------- #
# RoPE (rotate-half convention; QKV weights are de-interleaved offline to match
# the torchtune interleaved-pair RotaryPositionalEmbeddings exactly).
# --------------------------------------------------------------------------- #

def build_rope_tables_half(seq_len, head_dim, base=10000.0):
    inv = 1.0 / (base ** (jnp.arange(0, head_dim, 2, dtype=jnp.float32) / head_dim))
    t = jnp.arange(seq_len, dtype=jnp.float32)
    freqs = jnp.outer(t, inv)                                    # (S, Dh/2)
    cos = jnp.concatenate([jnp.cos(freqs), jnp.cos(freqs)], axis=-1)   # (S, Dh)
    sin = jnp.sin(freqs)
    sin_signed = jnp.concatenate([-sin, sin], axis=-1)                 # (S, Dh)
    return cos, sin_signed


def _deinterleave_perm(head_dim):
    # new channel j<half -> old 2j ; j>=half -> old 2(j-half)+1
    half = head_dim // 2
    j = jnp.arange(head_dim)
    return jnp.where(j < half, 2 * j, 2 * (j - half) + 1)


def _qk_channel_perm(d_model, n_heads):
    dh = d_model // n_heads
    p = _deinterleave_perm(dh)
    return (jnp.arange(n_heads)[:, None] * dh + p[None, :]).reshape(-1)


# --------------------------------------------------------------------------- #
# Fused LayerNorm + Linear kernel:  y = LN(x) @ W + b  (+ optional ReLU)
#   Full d_in is resident in each x block (single k step) so LN is computed
#   in-kernel (f32 stats), then the normalized block is cast to bf16 for the MXU.
# --------------------------------------------------------------------------- #

def _linear_ln_kernel(x_ref, g_ref, bln_ref, w_ref, b_ref, o_ref, *, eps, activation):
    x = x_ref[...].astype(jnp.float32)                           # (tm, d_in)
    mu = jnp.mean(x, axis=-1, keepdims=True)
    xc = x - mu
    var = jnp.mean(xc * xc, axis=-1, keepdims=True)
    h = xc * lax.rsqrt(var + eps) * g_ref[...].astype(jnp.float32) \
        + bln_ref[...].astype(jnp.float32)
    y = jnp.dot(h.astype(jnp.bfloat16), w_ref[...].astype(jnp.bfloat16),
                preferred_element_type=jnp.float32)              # (tm, tn) f32
    y = y + b_ref[...].astype(jnp.float32)
    if activation == "relu":
        y = jnp.maximum(y, 0.0)
    o_ref[...] = y.astype(o_ref.dtype)


def linear_ln_pallas(x2d, gamma, beta, w_t, b, activation=None,
                     out_dtype=jnp.bfloat16, eps=1e-5):
    N, d_in = x2d.shape
    d_in2, d_out = w_t.shape
    assert d_in == d_in2
    tm = _tile_rows(N)
    tn = _tile_lanes(d_out, (256, 128))
    grid = (N // tm, d_out // tn)

    return pl.pallas_call(
        functools.partial(_linear_ln_kernel, eps=eps, activation=activation),
        out_shape=jax.ShapeDtypeStruct((N, d_out), out_dtype),
        grid_spec=pltpu.PrefetchScalarGridSpec(
            num_scalar_prefetch=0,
            grid=grid,
            in_specs=[
                pl.BlockSpec((tm, d_in), lambda i, j: (i, 0)),
                pl.BlockSpec((1, d_in), lambda i, j: (0, 0)),
                pl.BlockSpec((1, d_in), lambda i, j: (0, 0)),
                pl.BlockSpec((d_in, tn), lambda i, j: (0, j)),
                pl.BlockSpec((1, tn), lambda i, j: (0, j)),
            ],
            out_specs=pl.BlockSpec((tm, tn), lambda i, j: (i, j)),
        ),
        compiler_params=pltpu.CompilerParams(
            dimension_semantics=("parallel", "parallel"),
            vmem_limit_bytes=VMEM_LIMIT_BYTES),
    )(x2d, gamma.reshape(1, d_in), beta.reshape(1, d_in), w_t, b.reshape(1, d_out))


# --------------------------------------------------------------------------- #
# Plain tiled Linear kernel (k-loop, f32 VMEM accumulator):
#   y = x @ W + b (+ optional residual).  Operands fed to the MXU in bf16.
# --------------------------------------------------------------------------- #

def _linear_kernel(*refs, n_k, has_residual):
    if has_residual:
        x_ref, w_ref, b_ref, r_ref, o_ref, acc_ref = refs
    else:
        x_ref, w_ref, b_ref, o_ref, acc_ref = refs
        r_ref = None

    @pl.when(pl.program_id(2) == 0)
    def _init():
        acc_ref[...] = jnp.zeros_like(acc_ref)

    acc_ref[...] += jnp.dot(
        x_ref[...].astype(jnp.bfloat16), w_ref[...].astype(jnp.bfloat16),
        preferred_element_type=jnp.float32)

    @pl.when(pl.program_id(2) == n_k - 1)
    def _finalize():
        y = acc_ref[...] + b_ref[...].astype(jnp.float32)
        if r_ref is not None:
            y = y + r_ref[...].astype(jnp.float32)
        o_ref[...] = y.astype(o_ref.dtype)


def linear_pallas(x2d, w_t, b, residual=None, out_dtype=jnp.float32):
    N, d_in = x2d.shape
    d_in2, d_out = w_t.shape
    assert d_in == d_in2
    tm = _tile_rows(N)
    tn = _tile_lanes(d_out, (256, 128))
    tk = _tile_lanes(d_in, (256, 128))
    grid = (N // tm, d_out // tn, d_in // tk)

    in_specs = [
        pl.BlockSpec((tm, tk), lambda i, j, k: (i, k)),
        pl.BlockSpec((tk, tn), lambda i, j, k: (k, j)),
        pl.BlockSpec((1, tn), lambda i, j, k: (0, j)),
    ]
    args = [x2d, w_t, b.reshape(1, d_out)]
    if residual is not None:
        in_specs.append(pl.BlockSpec((tm, tn), lambda i, j, k: (i, j)))
        args.append(residual)

    kernel = functools.partial(_linear_kernel, n_k=grid[2],
                               has_residual=residual is not None)

    return pl.pallas_call(
        kernel,
        out_shape=jax.ShapeDtypeStruct((N, d_out), out_dtype),
        grid_spec=pltpu.PrefetchScalarGridSpec(
            num_scalar_prefetch=0,
            grid=grid,
            in_specs=in_specs,
            out_specs=pl.BlockSpec((tm, tn), lambda i, j, k: (i, j)),
            scratch_shapes=[pltpu.VMEM((tm, tn), jnp.float32)],
        ),
        compiler_params=pltpu.CompilerParams(
            dimension_semantics=("parallel", "parallel", "arbitrary"),
            vmem_limit_bytes=VMEM_LIMIT_BYTES),
    )(*args)


# --------------------------------------------------------------------------- #
# Attention kernel.  Grid = (batch, q-tile); the fused (B, T, 3*d_model) QKV
# tensor is passed three times with feature-block indices 0/1/2 so q fetches
# only the current q-tile rows while K/V blocks are reused across q-tiles.
# Rotate-half RoPE via pltpu.roll; key-padding mask from scalar-prefetched
# lengths; all heads accumulate into a (Tq, d_model) f32 scratch and the output
# gets a single lane-dense store.
# --------------------------------------------------------------------------- #

def _attn_kernel(len_ref, q_ref, k_ref, v_ref, cq_ref, sq_ref, ck_ref, sk_ref,
                 o_ref, acc_ref, *, n_heads, head_dim, scale):
    b = pl.program_id(0)
    length = len_ref[b]                                          # scalar from SMEM
    Tq = q_ref.shape[1]
    S = k_ref.shape[1]
    half = head_dim // 2

    cos_q = cq_ref[...] * scale            # fold 1/sqrt(Dh) into q-side tables
    sin_q = sq_ref[...] * scale
    cos_k = ck_ref[...]
    sin_k = sk_ref[...]

    # key-padding mask (True = attend), shared by all heads / query rows.
    kmask = lax.broadcasted_iota(jnp.int32, (Tq, S), 1) < length

    for h in range(n_heads):               # n_heads is a compile-time constant
        lo = h * head_dim
        q_h = q_ref[0, :, lo:lo + head_dim].astype(jnp.float32)  # (Tq, Dh)
        k_h = k_ref[0, :, lo:lo + head_dim].astype(jnp.float32)  # (S, Dh)
        v_h = v_ref[0, :, lo:lo + head_dim]                      # (S, Dh) bf16

        # rotate-half RoPE: rope(x) = x*cos + roll(x, Dh/2)*sin_signed (XLU roll)
        q_h = q_h * cos_q + pltpu.roll(q_h, shift=half, axis=1) * sin_q
        k_h = k_h * cos_k + pltpu.roll(k_h, shift=half, axis=1) * sin_k

        s = lax.dot_general(q_h.astype(jnp.bfloat16), k_h.astype(jnp.bfloat16),
                            (((1,), (1,)), ((), ())),
                            preferred_element_type=jnp.float32)  # (Tq, S) f32
        s = jnp.where(kmask, s, jnp.float32(-1e30))
        m = jnp.max(s, axis=-1, keepdims=True)
        p = jnp.exp(s - m)
        denom = jnp.sum(p, axis=-1, keepdims=True)
        p = p * pl.reciprocal(denom, approx=True)                # EUP, frees VALU

        o_h = jnp.dot(p.astype(v_h.dtype), v_h,
                      preferred_element_type=jnp.float32)        # (Tq, Dh) f32
        acc_ref[:, lo:lo + head_dim] = o_h

    o_ref[0, :, :] = acc_ref[...].astype(o_ref.dtype)            # lane-dense store


def attention_pallas(qkv, lengths, cos, sin, n_heads, out_dtype=jnp.bfloat16):
    B, T, HD3 = qkv.shape
    HD = HD3 // 3
    head_dim = HD // n_heads
    scale = 1.0 / math.sqrt(head_dim)
    q_tile = _tile_rows(T, (256, 128))
    grid = (B, T // q_tile)

    return pl.pallas_call(
        functools.partial(_attn_kernel, n_heads=n_heads, head_dim=head_dim,
                          scale=scale),
        out_shape=jax.ShapeDtypeStruct((B, T, HD), out_dtype),
        grid_spec=pltpu.PrefetchScalarGridSpec(
            num_scalar_prefetch=1,                               # lengths -> SMEM
            grid=grid,
            in_specs=[
                pl.BlockSpec((1, q_tile, HD), lambda b, qi, lens: (b, qi, 0)),  # q
                pl.BlockSpec((1, T, HD), lambda b, qi, lens: (b, 0, 1)),        # k
                pl.BlockSpec((1, T, HD), lambda b, qi, lens: (b, 0, 2)),        # v
                pl.BlockSpec((q_tile, head_dim), lambda b, qi, lens: (qi, 0)),  # cos_q
                pl.BlockSpec((q_tile, head_dim), lambda b, qi, lens: (qi, 0)),  # sin_q
                pl.BlockSpec((T, head_dim), lambda b, qi, lens: (0, 0)),        # cos_k
                pl.BlockSpec((T, head_dim), lambda b, qi, lens: (0, 0)),        # sin_k
            ],
            out_specs=pl.BlockSpec((1, q_tile, HD), lambda b, qi, lens: (b, qi, 0)),
            scratch_shapes=[pltpu.VMEM((q_tile, HD), jnp.float32)],
        ),
        compiler_params=pltpu.CompilerParams(
            dimension_semantics=("parallel", "parallel"),
            vmem_limit_bytes=VMEM_LIMIT_BYTES),
    )(lengths, qkv, qkv, qkv, cos, sin, cos, sin)


# --------------------------------------------------------------------------- #
# Parameter preparation (offline, free): fuse + de-interleave QKV, transpose all
# weights to (d_in, d_out), cast weights to bf16 (biases / LN params stay f32).
# --------------------------------------------------------------------------- #

def prepare_layer_params(raw, d_model, n_heads):
    perm = _qk_channel_perm(d_model, n_heads)
    wq, bq = raw["wq"][perm], raw["bq"][perm]
    wk, bk = raw["wk"][perm], raw["bk"][perm]
    wqkv = jnp.concatenate([wq, wk, raw["wv"]], axis=0)          # (3dm, dm) torch layout
    bqkv = jnp.concatenate([bq, bk, raw["bv"]], axis=0)
    return dict(
        ln1_g=raw["ln1_g"], ln1_b=raw["ln1_b"],
        ln2_g=raw["ln2_g"], ln2_b=raw["ln2_b"],
        wqkv_t=wqkv.T.astype(jnp.bfloat16), bqkv=bqkv,           # (dm, 3dm)
        wo_t=raw["wo"].T.astype(jnp.bfloat16), bo=raw["bo"],
        w1_t=raw["w1"].T.astype(jnp.bfloat16), b1=raw["b1"],
        w2_t=raw["w2"].T.astype(jnp.bfloat16), b2=raw["b2"])


# --------------------------------------------------------------------------- #
# Encoder forward (stack of EncoderLayer: pre-LN attention + pre-LN FFN)
# --------------------------------------------------------------------------- #

def encoder_forward(x, params, encoder_mask, n_heads):
    B, T, d_model = x.shape
    head_dim = d_model // n_heads

    # prefix padding mask -> per-batch valid lengths (True = attend)
    lengths = jnp.sum(encoder_mask.astype(jnp.int32), axis=1)

    # pad T up to a sublane multiple; padded keys are masked (pos >= length),
    # padded query rows are sliced off at the end.
    T_pad = ((T + 7) // 8) * 8
    if T_pad != T:
        x = jnp.pad(x, ((0, 0), (0, T_pad - T), (0, 0)))

    cos, sin = build_rope_tables_half(T_pad, head_dim)
    N = B * T_pad
    x2d = x.reshape(N, d_model)                                  # f32 residual stream

    for p in params["layers"]:
        # ---- x = x + SelfAttn(LN1(x), mask) ----
        qkv = linear_ln_pallas(x2d, p["ln1_g"], p["ln1_b"], p["wqkv_t"], p["bqkv"],
                               out_dtype=jnp.bfloat16)
        attn = attention_pallas(qkv.reshape(B, T_pad, 3 * d_model), lengths,
                                cos, sin, n_heads, out_dtype=jnp.bfloat16)
        x2d = linear_pallas(attn.reshape(N, d_model), p["wo_t"], p["bo"],
                            residual=x2d, out_dtype=jnp.float32)
        # ---- x = x + FFN(LN2(x)) ----
        h = linear_ln_pallas(x2d, p["ln2_g"], p["ln2_b"], p["w1_t"], p["b1"],
                             activation="relu", out_dtype=jnp.bfloat16)
        x2d = linear_pallas(h, p["w2_t"], p["b2"], residual=x2d,
                            out_dtype=jnp.float32)

    out = x2d.reshape(B, T_pad, d_model)
    return out[:, :T] if T_pad != T else out


# --------------------------------------------------------------------------- #
# main
# --------------------------------------------------------------------------- #

if __name__ == "__main__":
    B, T, d_model, n_heads, n_layers = 2, 16, 128, 4, 2
    key = jax.random.PRNGKey(0)

    def init_linear(k, d_in, d_out, scale=0.05):
        kw, kb = jax.random.split(k)
        w = scale * jax.random.normal(kw, (d_out, d_in), jnp.float32)   # torch layout
        b = scale * jax.random.normal(kb, (d_out,), jnp.float32)
        return w, b

    keys = jax.random.split(key, n_layers + 1)
    layers = []
    for li in range(n_layers):
        lk = jax.random.split(keys[li], 6)
        wq, bq = init_linear(lk[0], d_model, d_model)
        wk, bk = init_linear(lk[1], d_model, d_model)
        wv, bv = init_linear(lk[2], d_model, d_model)
        wo, bo = init_linear(lk[3], d_model, d_model)
        w1, b1 = init_linear(lk[4], d_model, 4 * d_model)
        w2, b2 = init_linear(lk[5], 4 * d_model, d_model)
        raw = dict(
            ln1_g=jnp.ones((d_model,), jnp.float32),
            ln1_b=jnp.zeros((d_model,), jnp.float32),
            ln2_g=jnp.ones((d_model,), jnp.float32),
            ln2_b=jnp.zeros((d_model,), jnp.float32),
            wq=wq, bq=bq, wk=wk, bk=bk, wv=wv, bv=bv,
            wo=wo, bo=bo, w1=w1, b1=b1, w2=w2, b2=b2)
        layers.append(prepare_layer_params(raw, d_model, n_heads))
    params = dict(layers=layers)

    x = jax.random.normal(keys[-1], (B, T, d_model), jnp.float32)
    lengths_true = jnp.array([T, T - 5], dtype=jnp.int32)
    encoder_mask = jnp.arange(T)[None, :] < lengths_true[:, None]   # (B, T) bool

    out = encoder_forward(x, params, encoder_mask, n_heads)
    out = jax.block_until_ready(out)
    assert out.shape == (B, T, d_model)
    assert bool(jnp.all(jnp.isfinite(out)))
    print("KERNEL_OK")
</pallas_src>

<mosaic_0001>
module attributes {stable_mosaic.version = 11 : i64} {
  func.func @_linear_ln_kernel(%arg0: i32, %arg1: i32, %arg2: memref<32x128xf32, #tpu.memory_space<vmem>>, %arg3: memref<1x128xf32, #tpu.memory_space<vmem>>, %arg4: memref<1x128xf32, #tpu.memory_space<vmem>>, %arg5: memref<128x128xbf16, #tpu.memory_space<vmem>>, %arg6: memref<1x128xf32, #tpu.memory_space<vmem>>, %arg7: memref<32x128xbf16, #tpu.memory_space<vmem>>) attributes {dimension_semantics = [#tpu.dimension_semantics<parallel>, #tpu.dimension_semantics<parallel>], iteration_bounds = array<i64: 1, 3>, scalar_prefetch = 0 : i64, scratch_operands = 0 : i64, tpu.core_type = #tpu.core_type<tc>, window_params = [{transform_indices = @transform_0, window_bounds = array<i64: 32, 128>}, {pipeline_mode = #tpu.pipeline_mode<synchronous>, transform_indices = @transform_1, window_bounds = array<i64: 1, 128>}, {pipeline_mode = #tpu.pipeline_mode<synchronous>, transform_indices = @transform_2, window_bounds = array<i64: 1, 128>}, {transform_indices = @transform_3, window_bounds = array<i64: 128, 128>}, {transform_indices = @transform_4, window_bounds = array<i64: 1, 128>}, {transform_indices = @transform_5, window_bounds = array<i64: 32, 128>}]} {
    %c0 = arith.constant 0 : index
    %c0_0 = arith.constant 0 : index
    %0 = vector.load %arg2[%c0, %c0_0] : memref<32x128xf32, #tpu.memory_space<vmem>>, vector<32x128xf32>
    %cst = arith.constant dense<0.000000e+00> : vector<32xf32>
    %1 = vector.multi_reduction <add>, %0, %cst [1] : vector<32x128xf32> to vector<32xf32>
    %2 = vector.shape_cast %1 : vector<32xf32> to vector<32x1xf32>
    %cst_1 = arith.constant 1.280000e+02 : f32
    %3 = vector.broadcast %cst_1 : f32 to vector<32x1xf32>
    %4 = arith.divf %2, %3 : vector<32x1xf32>
    %5 = vector.broadcast %4 : vector<32x1xf32> to vector<32x128xf32>
    %6 = arith.subf %0, %5 : vector<32x128xf32>
    %7 = arith.mulf %6, %6 : vector<32x128xf32>
    %cst_2 = arith.constant dense<0.000000e+00> : vector<32xf32>
    %8 = vector.multi_reduction <add>, %7, %cst_2 [1] : vector<32x128xf32> to vector<32xf32>
    %9 = vector.shape_cast %8 : vector<32xf32> to vector<32x1xf32>
    %cst_3 = arith.constant 1.280000e+02 : f32
    %10 = vector.broadcast %cst_3 : f32 to vector<32x1xf32>
    %11 = arith.divf %9, %10 : vector<32x1xf32>
    %cst_4 = arith.constant 9.99999974E-6 : f32
    %12 = vector.broadcast %cst_4 : f32 to vector<32x1xf32>
    %13 = arith.addf %11, %12 : vector<32x1xf32>
    %14 = math.rsqrt %13 : vector<32x1xf32>
    %15 = vector.broadcast %14 : vector<32x1xf32> to vector<32x128xf32>
    %16 = arith.mulf %6, %15 : vector<32x128xf32>
    %c0_5 = arith.constant 0 : index
    %c0_6 = arith.constant 0 : index
    %17 = vector.load %arg3[%c0_5, %c0_6] : memref<1x128xf32, #tpu.memory_space<vmem>>, vector<1x128xf32>
    %18 = vector.broadcast %17 : vector<1x128xf32> to vector<32x128xf32>
    %19 = arith.mulf %16, %18 : vector<32x128xf32>
    %c0_7 = arith.constant 0 : index
    %c0_8 = arith.constant 0 : index
    %20 = vector.load %arg4[%c0_7, %c0_8] : memref<1x128xf32, #tpu.memory_space<vmem>>, vector<1x128xf32>
    %21 = vector.broadcast %20 : vector<1x128xf32> to vector<32x128xf32>
    %22 = arith.addf %19, %21 : vector<32x128xf32>
    %23 = arith.truncf %22 : vector<32x128xf32> to vector<32x128xbf16>
    %c0_9 = arith.constant 0 : index
    %c0_10 = arith.constant 0 : index
    %24 = vector.load %arg5[%c0_9, %c0_10] : memref<128x128xbf16, #tpu.memory_space<vmem>>, vector<128x128xbf16>
    %cst_11 = arith.constant dense<0.000000e+00> : vector<32x128xf32>
    %25 = tpu.matmul %23, %24, %cst_11 {dimension_numbers = #tpu.dot_dimension_numbers<[1], [0], [0], [1], [0, 0, 1, 1], [], []>} : vector<32x128xbf16>, vector<128x128xbf16>, vector<32x128xf32> -> vector<32x128xf32>
    %c0_12 = arith.constant 0 : index
    %c0_13 = arith.constant 0 : index
    %26 = vector.load %arg6[%c0_12, %c0_13] : memref<1x128xf32, #tpu.memory_space<vmem>>, vector<1x128xf32>
    %27 = vector.broadcast %26 : vector<1x128xf32> to vector<32x128xf32>
    %28 = arith.addf %25, %27 : vector<32x128xf32>
    %29 = arith.truncf %28 : vector<32x128xf32> to vector<32x128xbf16>
    %c0_14 = arith.constant 0 : index
    %c0_15 = arith.constant 0 : index
    %30 = vector.load %arg7[%c0_14, %c0_15] : memref<32x128xbf16, #tpu.memory_space<vmem>>, vector<32x128xbf16>
    tpu.vector_store %arg7[%c0_14, %c0_15], %29 {strides = array<i32>} : memref<32x128xbf16, #tpu.memory_space<vmem>>, vector<32x128xbf16>,
    return
  }
  func.func @transform_0(%arg0: i32, %arg1: i32) -> (i32, i32) {
    %c0_i32 = arith.constant 0 : i32
    %c0_i32_0 = arith.constant 0 : i32
    return %arg0, %c0_i32 : i32, i32
  }
  func.func @transform_1(%arg0: i32, %arg1: i32) -> (i32, i32) {
    %c0_i32 = arith.constant 0 : i32
    %c0_i32_0 = arith.constant 0 : i32
    %c0_i32_1 = arith.constant 0 : i32
    return %c0_i32, %c0_i32_0 : i32, i32
  }
  func.func @transform_2(%arg0: i32, %arg1: i32) -> (i32, i32) {
    %c0_i32 = arith.constant 0 : i32
    %c0_i32_0 = arith.constant 0 : i32
    %c0_i32_1 = arith.constant 0 : i32
    return %c0_i32, %c0_i32_0 : i32, i32
  }
  func.func @transform_3(%arg0: i32, %arg1: i32) -> (i32, i32) {
    %c0_i32 = arith.constant 0 : i32
    %c0_i32_0 = arith.constant 0 : i32
    return %c0_i32, %arg1 : i32, i32
  }
  func.func @transform_4(%arg0: i32, %arg1: i32) -> (i32, i32) {
    %c0_i32 = arith.constant 0 : i32
    %c0_i32_0 = arith.constant 0 : i32
    return %c0_i32, %arg1 : i32, i32
  }
  func.func @transform_5(%arg0: i32, %arg1: i32) -> (i32, i32) {
    %c0_i32 = arith.constant 0 : i32
    return %arg0, %arg1 : i32, i32
  }
}

</mosaic_0001>

<llo_original>
// kernel: tpu_custom_call.1
$region0: #{tpu_custom_call.1}
  #allocation0 [shape = 'u32[]', space=smem, size = 0x4, offset = 0x4, fixed_abs, tag = 'smem constant byte address 0x4 - core index']
  #allocation1 [shape = 'u32[144,128]{1,0:T(1,128)}', space=vmem, size = 0x12000, scoped, tag = 'internal scratch']
  %s0 = inlined_call_operand.hbm [shape: f32[32,128], index: 0, kind: input, shape index: {}]
  %s1 = inlined_call_operand.vmem [shape: f32[1,128], index: 1, kind: input, shape index: {}]
  %s2 = inlined_call_operand.vmem [shape: f32[1,128], index: 2, kind: input, shape index: {}]
  %s3 = inlined_call_operand.hbm [shape: bf16[128,384], index: 3, kind: input, shape index: {}]
  %s4 = inlined_call_operand.vmem [shape: f32[1,384], index: 4, kind: input, shape index: {}]
  %s5 = inlined_call_operand.hbm [shape: bf16[32,384], index: 5, kind: output, shape index: {}]
  %s6 = sld [smem:[#allocation0]]
  $region61: #{tpu_custom_call.1} parent=0
    _
  %s8 = ssub.s32 1, %s6
  %s9 = scalar_select 0, %s8, %s6
  $region1: #{tpu_custom_call.1} parent=0
    #allocation2 [shape = 'u8[16384]{0}', space=vmem, size = 0x4000, scoped, tag = 'input window, operand 0, single buffered']
    #allocation3 [shape = 's32[2]{0}', space=sflag, size = 0x8, scoped, tag = 'scoped memory for tpu_custom_call.1']
    #allocation4 [shape = 's32[2]{0}', space=sflag, size = 0x8, scoped, tag = 'scoped memory for tpu_custom_call.1']
    #allocation5 [shape = 'u8[65536]{0}', space=vmem, size = 0x10000, scoped, tag = 'input window, operand 3']
    #allocation6 [shape = 's32[2]{0}', space=sflag, size = 0x8, scoped, tag = 'scoped memory for tpu_custom_call.1']
    #allocation7 [shape = 'u8[16384]{0}', space=vmem, size = 0x4000, scoped, tag = 'output window, operand 0']
    %10 = vsyncpa [#allocation3], 0
    %11 = vsyncpa [#allocation6], 0
    %s12 = scalar_lea.sflag [#allocation6], 1
    %13 = vsyncpa %s12, 0
    %14 = vsyncpa [#allocation4], 0
    %s15 = scalar_lea.sflag [#allocation4], 1
    %16 = vsyncpa %s15, 0
    loop: start=0, step=1, limit=5
    $region2: #{tpu_custom_call.1} parent=1 // loop_pre_header
      _
    $region3: #{tpu_custom_call.1} parent=1 // loop_header
      %s18 = sphi 0, %s22
      %p19 = scmp.ge.s32.totalorder %s18, 5
      %s25 = sphi 0, %s37
      %s26 = sphi 0, %s33
      %s27 = sphi 0, %s25
      %s28 = sphi 0, %s26
      %s29 = sphi 0, %s27
      %s30 = sphi 0, %s28
      %s40 = sphi 0, %s42
      %s43 = sphi 0, %s40
      %s44 = sphi 0, %s43
      %s60 = sphi 0, %s44
      %s64 = sphi 0, %s64
      %s66 = sphi 0, %s64
      %s67 = sphi 0, %s66
      %s81 = sphi 0, %s67
      %s85 = sphi 0, %s85
      %s87 = sphi 0, %s85
      %s88 = sphi 0, %s87
      %s102 = sphi 0, %s88
      %s108 = sphi 0, %s110
      %s111 = sphi 0, %s108
      %s112 = sphi 0, %s111
      %s128 = sphi 0, %s112
      %s134 = sphi 0, %s136
      %s137 = sphi 0, %s134
      %s138 = sphi 0, %s137
      %s154 = sphi 0, %s138
      %s162 = sphi 0, %s164
      %s165 = sphi 0, %s162
      %s166 = sphi 0, %s165
      %s182 = sphi 0, %s166
    $region4: #{tpu_custom_call.1} parent=1 // loop_header_branch
      %21 = sbr.rel (%p19) target = $region8
    $region5: #{tpu_custom_call.1} parent=1 // loop_body
      %s23 = ssub.s32 %s18, 1
      %s24 = ssub.s32 %s18, 2
      %s31 = sadd.s32 1, %s26
      %p32 = scmp.ge.s32.totalorder %s31, 3
      %s33 = scalar_select %p32, 0, %s31
      %s34 = sadd.s32 1, %s25
      %s35 = scalar_select %p32, %s34, %s25
      %p36 = scmp.ge.s32.totalorder %s35, 1
      %s37 = scalar_select %p36, 0, %s35
      %s38 = ssub.s32 %s25, %s37
      %p39 = scmp.eq.s32.totalorder %s38, 0
      %s41 = sadd.s32 %s40, 1
      %s42 = scalar_select %p39, %s40, %s41
      %p45 = pneg %p39
      %p46 = scmp.eq.s32.totalorder %s18, 2
      %p47 = por %p45, %p46
      %p48 = scmp.ne.s32.totalorder %s40, %s43
      %p49 = scmp.eq.s32.totalorder %s18, 0
      %p50 = por %p48, %p49
      %p51 = scmp.ne.s32.totalorder %s40, %s43
      %p52 = scmp.eq.s32.totalorder %s23, 2
      %p53 = por %p51, %p52
      %p54 = scmp.ne.s32.totalorder %s43, %s44
      %p55 = scmp.eq.s32.totalorder %s23, 0
      %p56 = por %p54, %p55
      %p57 = scmp.ne.s32.totalorder %s43, %s44
      %p58 = scmp.eq.s32.totalorder %s24, 2
      %p59 = por %p57, %p58
      %p61 = scmp.ne.s32.totalorder %s44, %s60
      %p62 = scmp.eq.s32.totalorder %s24, 0
      %p63 = por %p61, %p62
      %s65 = sadd.s32 %s64, 1
      %p68 = scmp.eq.s32.totalorder %s18, 2
      %p69 = scmp.ne.s32.totalorder %s64, %s66
      %p70 = scmp.eq.s32.totalorder %s18, 0
      %p71 = por %p69, %p70
      %p72 = scmp.ne.s32.totalorder %s64, %s66
      %p73 = scmp.eq.s32.totalorder %s23, 2
      %p74 = por %p72, %p73
      %p75 = scmp.ne.s32.totalorder %s66, %s67
      %p76 = scmp.eq.s32.totalorder %s23, 0
      %p77 = por %p75, %p76
      %p78 = scmp.ne.s32.totalorder %s66, %s67
      %p79 = scmp.eq.s32.totalorder %s24, 2
      %p80 = por %p78, %p79
      %p82 = scmp.ne.s32.totalorder %s67, %s81
      %p83 = scmp.eq.s32.totalorder %s24, 0
      %p84 = por %p82, %p83
      %s86 = sadd.s32 %s85, 1
      %p89 = scmp.eq.s32.totalorder %s18, 2
      %p90 = scmp.ne.s32.totalorder %s85, %s87
      %p91 = scmp.eq.s32.totalorder %s18, 0
      %p92 = por %p90, %p91
      %p93 = scmp.ne.s32.totalorder %s85, %s87
      %p94 = scmp.eq.s32.totalorder %s23, 2
      %p95 = por %p93, %p94
      %p96 = scmp.ne.s32.totalorder %s87, %s88
      %p97 = scmp.eq.s32.totalorder %s23, 0
      %p98 = por %p96, %p97
      %p99 = scmp.ne.s32.totalorder %s87, %s88
      %p100 = scmp.eq.s32.totalorder %s24, 2
      %p101 = por %p99, %p100
      %p103 = scmp.ne.s32.totalorder %s88, %s102
      %p104 = scmp.eq.s32.totalorder %s24, 0
      %p105 = por %p103, %p104
      %s106 = ssub.s32 %s26, %s33
      %p107 = scmp.eq.s32.totalorder %s106, 0
      %s109 = sadd.s32 %s108, 1
      %s110 = scalar_select %p107, %s108, %s109
      %p113 = pneg %p107
      %p114 = scmp.eq.s32.totalorder %s18, 2
      %p115 = por %p113, %p114
      %p116 = scmp.ne.s32.totalorder %s108, %s111
      %p117 = scmp.eq.s32.totalorder %s18, 0
      %p118 = por %p116, %p117
      %p119 = scmp.ne.s32.totalorder %s108, %s111
      %p120 = scmp.eq.s32.totalorder %s23, 2
      %p121 = por %p119, %p120
      %p122 = scmp.ne.s32.totalorder %s111, %s112
      %p123 = scmp.eq.s32.totalorder %s23, 0
      %p124 = por %p122, %p123
      %p125 = scmp.ne.s32.totalorder %s111, %s112
      %p126 = scmp.eq.s32.totalorder %s24, 2
      %p127 = por %p125, %p126
      %p129 = scmp.ne.s32.totalorder %s112, %s128
      %p130 = scmp.eq.s32.totalorder %s24, 0
      %p131 = por %p129, %p130
      %s132 = ssub.s32 %s26, %s33
      %p133 = scmp.eq.s32.totalorder %s132, 0
      %s135 = sadd.s32 %s134, 1
      %s136 = scalar_select %p133, %s134, %s135
      %p139 = pneg %p133
      %p140 = scmp.eq.s32.totalorder %s18, 2
      %p141 = por %p139, %p140
      %p142 = scmp.ne.s32.totalorder %s134, %s137
      %p143 = scmp.eq.s32.totalorder %s18, 0
      %p144 = por %p142, %p143
      %p145 = scmp.ne.s32.totalorder %s134, %s137
      %p146 = scmp.eq.s32.totalorder %s23, 2
      %p147 = por %p145, %p146
      %p148 = scmp.ne.s32.totalorder %s137, %s138
      %p149 = scmp.eq.s32.totalorder %s23, 0
      %p150 = por %p148, %p149
      %p151 = scmp.ne.s32.totalorder %s137, %s138
      %p152 = scmp.eq.s32.totalorder %s24, 2
      %p153 = por %p151, %p152
      %p155 = scmp.ne.s32.totalorder %s138, %s154
      %p156 = scmp.eq.s32.totalorder %s24, 0
      %p157 = por %p155, %p156
      %s158 = ssub.s32 %s25, %s37
      %s159 = ssub.s32 %s26, %s33
      %s160 = sor.u32 %s158, %s159
      %p161 = scmp.eq.s32.totalorder %s160, 0
      %s163 = sadd.s32 %s162, 1
      %s164 = scalar_select %p161, %s162, %s163
      %p167 = pneg %p161
      %p168 = scmp.eq.s32.totalorder %s18, 2
      %p169 = por %p167, %p168
      %p170 = scmp.ne.s32.totalorder %s162, %s165
      %p171 = scmp.eq.s32.totalorder %s18, 0
      %p172 = por %p170, %p171
      %p173 = scmp.ne.s32.totalorder %s162, %s165
      %p174 = scmp.eq.s32.totalorder %s23, 2
      %p175 = por %p173, %p174
      %p176 = scmp.ne.s32.totalorder %s165, %s166
      %p177 = scmp.eq.s32.totalorder %s23, 0
      %p178 = por %p176, %p177
      %p179 = scmp.ne.s32.totalorder %s165, %s166
      %p180 = scmp.eq.s32.totalorder %s24, 2
      %p181 = por %p179, %p180
      %p183 = scmp.ne.s32.totalorder %s166, %s182
      %p184 = scmp.eq.s32.totalorder %s24, 0
      %p185 = por %p183, %p184
      %p186 = scmp.le.s32.totalorder 1, %s18
      %p187 = scmp.lt.s32.totalorder %s18, 4
      %p188 = pnand %p186, %p187
      %p189 = pneg %p188
      // Predicated region
      $region9: #{tpu_custom_call.1} parent=5 // pred_check
        _
      $region10: #{tpu_custom_call.1} parent=5 // pred_check_branch
        %191 = sbr.rel (%p188) target = $region12
      $region11: #{tpu_custom_call.1} parent=5 // pred_region
        %s192 = ssub.s32 %s18, 1
        // Predicated region
        $region13: #{tpu_custom_call.1} parent=11 // pred_check
          %p193 = pneg %p56
        $region14: #{tpu_custom_call.1} parent=11 // pred_check_branch
          %195 = sbr.rel (%p193) target = $region16
        $region15: #{tpu_custom_call.1} parent=11 // pred_region
          %s196 = smul.u32 4, %s27
          %s198 = ssub.s32 512, 512
          %199 = vsyncadd [#allocation3], %s198
          %s200 = smul.addr %s196, 128
          %s201 = scalar_lea.hbm %s0, %s200
          %s202 = sshll.u32 [#allocation2], 4
          %s203 = int_to_ptr.vmem [resolvable:$true] %s202
          %208 = dma.hbm_to_vmem [thread:$0]  %s201, 512, %s203, [#allocation3], 128, 128, 8
        $region16: #{tpu_custom_call.1} parent=11 // pred_fallthru
          _
        // Predicated region
        $region17: #{tpu_custom_call.1} parent=11 // pred_check
          %p209 = pneg %p77
        $region18: #{tpu_custom_call.1} parent=11 // pred_check_branch
          %211 = sbr.rel (%p209) target = $region20
        $region19: #{tpu_custom_call.1} parent=11 // pred_region
          _
        $region20: #{tpu_custom_call.1} parent=11 // pred_fallthru
          _
        // Predicated region
        $region21: #{tpu_custom_call.1} parent=11 // pred_check
          %p212 = pneg %p98
        $region22: #{tpu_custom_call.1} parent=11 // pred_check_branch
          %214 = sbr.rel (%p212) target = $region24
        $region23: #{tpu_custom_call.1} parent=11 // pred_region
          _
        $region24: #{tpu_custom_call.1} parent=11 // pred_fallthru
          _
      $region12: #{tpu_custom_call.1} parent=5 // pred_fallthru
        _
      %p215 = scmp.lt.s32.totalorder %s18, 3
      // Predicated region
      $region25: #{tpu_custom_call.1} parent=5 // pred_check
        %p216 = pneg %p215
      $region26: #{tpu_custom_call.1} parent=5 // pred_check_branch
        %218 = sbr.rel (%p216) target = $region28
      $region27: #{tpu_custom_call.1} parent=5 // pred_region
        // Predicated region
        $region29: #{tpu_custom_call.1} parent=27 // pred_check
          %p219 = pneg %p118
        $region30: #{tpu_custom_call.1} parent=27 // pred_check_branch
          %221 = sbr.rel (%p219) target = $region32
        $region31: #{tpu_custom_call.1} parent=27 // pred_region
          %s222 = sand.u32 %s108, 1
          %s223 = scalar_lea.sflag [#allocation6], %s222
          %s224 = sand.u32 %s108, 1
          %s225 = smul.addr %s224, 64
          %s226 = scalar_lea.vmem [#allocation5], %s225
          %s228 = ssub.s32 1024, 1024
          %229 = vsyncadd %s223, %s228
          %s230 = smul.addr %s26, 64
          %s231 = scalar_lea.hbm %s3, %s230
          %s232 = sshll.u32 %s226, 4
          %s233 = int_to_ptr.vmem [resolvable:$true] %s232
          %238 = dma.hbm_to_vmem [thread:$0]  %s231, 1024, %s233, %s223, 192, 64, 4
        $region32: #{tpu_custom_call.1} parent=27 // pred_fallthru
          _
        // Predicated region
        $region33: #{tpu_custom_call.1} parent=27 // pred_check
          %p239 = pneg %p144
        $region34: #{tpu_custom_call.1} parent=27 // pred_check_branch
          %241 = sbr.rel (%p239) target = $region36
        $region35: #{tpu_custom_call.1} parent=27 // pred_region
          %p242 = scmp.lt.s32.totalorder %s26, 2
          %s243 = scalar_select %p242, %s26, 2
          %s244 = scalar_lea.vmem %s4, %s243
        $region36: #{tpu_custom_call.1} parent=27 // pred_fallthru
          _
      $region28: #{tpu_custom_call.1} parent=5 // pred_fallthru
        _
      %p245 = scmp.le.s32.totalorder 1, %s18
      %p246 = scmp.lt.s32.totalorder %s18, 4
      %p247 = pnand %p245, %p246
      %p248 = pneg %p247
      // Predicated region
      $region37: #{tpu_custom_call.1} parent=5 // pred_check
        _
      $region38: #{tpu_custom_call.1} parent=5 // pred_check_branch
        %250 = sbr.rel (%p247) target = $region40
      $region39: #{tpu_custom_call.1} parent=5 // pred_region
        %s251 = ssub.s32 %s18, 1
        // Predicated region
        $region41: #{tpu_custom_call.1} parent=39 // pred_check
          %p252 = pneg %p56
        $region42: #{tpu_custom_call.1} parent=39 // pred_check_branch
          %254 = sbr.rel (%p252) target = $region44
        $region43: #{tpu_custom_call.1} parent=39 // pred_region
          %255 = dma.done [#allocation3], 512
        $region44: #{tpu_custom_call.1} parent=39 // pred_fallthru
          _
        %s256 = sand.u32 %s111, 1
        %s257 = scalar_lea.sflag [#allocation6], %s256
        %s258 = sand.u32 %s111, 1
        %s259 = smul.addr %s258, 64
        %s260 = scalar_lea.vmem [#allocation5], %s259
        // Predicated region
        $region45: #{tpu_custom_call.1} parent=39 // pred_check
          %p261 = pneg %p124
        $region46: #{tpu_custom_call.1} parent=39 // pred_check_branch
          %263 = sbr.rel (%p261) target = $region48
        $region47: #{tpu_custom_call.1} parent=39 // pred_region
          %264 = dma.done %s257, 1024
        $region48: #{tpu_custom_call.1} parent=39 // pred_fallthru
          _
        %p265 = pneg %p56
        %p266 = pneg %p53
        %p267 = pneg %p77
        %p268 = pneg %p74
        %p269 = pneg %p98
        %p270 = pneg %p95
        %s271 = sand.u32 %s111, 1
        %s272 = scalar_lea.sflag [#allocation6], %s271
        %s273 = sand.u32 %s111, 1
        %s274 = smul.addr %s273, 64
        %s275 = scalar_lea.vmem [#allocation5], %s274
        %p276 = pneg %p124
        %p277 = pneg %p121
        %p278 = scmp.lt.s32.totalorder %s28, 2
        %s279 = scalar_select %p278, %s28, 2
        %s280 = scalar_lea.vmem %s4, %s279
        %p281 = pneg %p150
        %p282 = pneg %p147
        %p283 = pneg %p178
        %p284 = pneg %p175
        %s285 = sand.u32 %s165, 1
        %s286 = scalar_lea.sflag [#allocation4], %s285
        %s287 = sand.u32 %s165, 1
        %s288 = smul.addr %s287, 16
        %s289 = scalar_lea.vmem [#allocation7], %s288
        %s290 = smul.u32 4, %s27
        %p291 = scmp.lt.s32.totalorder %s28, 2
        %s292 = scalar_select %p291, %s28, 2
        %s293 = scalar_lea.vmem %s4, %s292
        %s294 = smul.u32 4, %s27
        %v296 = vld [vmem:[#allocation2] sm:$0xff]
        %v297 = vld [vmem:[#allocation2 + $0x8] sm:$0xff]
        %v298 = vld [vmem:[#allocation2 + $0x10] sm:$0xff]
        %v299 = vld [vmem:[#allocation2 + $0x18] sm:$0xff]
        %300 = vadd.xlane.f32.xlu0 %v296
        %v301 = vpop.xlane.xlu0 %300
        %302 = vadd.xlane.f32.xlu0 %v297
        %v303 = vpop.xlane.xlu0 %302
        %304 = vadd.xlane.f32.xlu0 %v298
        %v305 = vpop.xlane.xlu0 %304
        %306 = vadd.xlane.f32.xlu0 %v299
        %v307 = vpop.xlane.xlu0 %306
        %v308 = vrcp.pop 128.0
        %v309 = vmul.f32 %v301, %v308
        %v310 = vmul.f32 %v303, %v308
        %v311 = vmul.f32 %v305, %v308
        %v312 = vmul.f32 %v307, %v308
        %v313 = vsub.f32 %v296, %v309
        %v314 = vsub.f32 %v297, %v310
        %v315 = vsub.f32 %v298, %v311
        %v316 = vsub.f32 %v299, %v312
        %v317 = vmul.f32 %v313, %v313
        %v318 = vmul.f32 %v314, %v314
        %v319 = vmul.f32 %v315, %v315
        %v320 = vmul.f32 %v316, %v316
        %321 = vadd.xlane.f32.xlu0 %v317
        %v322 = vpop.xlane.xlu0 %321
        %323 = vadd.xlane.f32.xlu0 %v318
        %v324 = vpop.xlane.xlu0 %323
        %325 = vadd.xlane.f32.xlu0 %v319
        %v326 = vpop.xlane.xlu0 %325
        %327 = vadd.xlane.f32.xlu0 %v320
        %v328 = vpop.xlane.xlu0 %327
        %v329 = vmul.f32 %v322, %v308
        %v330 = vmul.f32 %v324, %v308
        %v331 = vmul.f32 %v326, %v308
        %v332 = vmul.f32 %v328, %v308
        %v333 = vadd.f32 %v329, 1e-05
        %v334 = vadd.f32 %v330, 1e-05
        %v335 = vadd.f32 %v331, 1e-05
        %v336 = vadd.f32 %v332, 1e-05
        %v337 = vrsqrt.pop %v333
        %v338 = vrsqrt.pop %v334
        %v339 = vrsqrt.pop %v335
        %v340 = vrsqrt.pop %v336
        %v341 = vmul.f32 %v313, %v337
        %v342 = vmul.f32 %v314, %v338
        %v343 = vmul.f32 %v315, %v339
        %v344 = vmul.f32 %v316, %v340
        %v345 = vld [vmem:[%s1] sm:$0x1]
        %v347 = vlaneseq
        %v348 = vshrl.u32 %v347, 7
        %v349 = vsub.s32 0, %v348
        %v350 = vrot.slane %v345, %v349
        %v352 = vmul.f32 %v341, %v350
        %v353 = vmul.f32 %v342, %v350
        %v354 = vmul.f32 %v343, %v350
        %v355 = vmul.f32 %v344, %v350
        %v356 = vld [vmem:[%s2] sm:$0x1]
        %v358 = vlaneseq
        %v359 = vshrl.u32 %v358, 7
        %v360 = vsub.s32 0, %v359
        %v361 = vrot.slane %v356, %v360
        %v363 = vadd.f32 %v352, %v361
        %v364 = vadd.f32 %v353, %v361
        %v365 = vadd.f32 %v354, %v361
        %v366 = vadd.f32 %v355, %v361
        %v367 = vpack.c.bf16 %v364, %v363
        %v368 = vpack.c.bf16 %v366, %v365
        %v369 = vld [vmem:[%s260] sm:$0xf]
        %v370 = vld [vmem:[%s260 + $0x4] sm:$0xf]
        %v371 = vld [vmem:[%s260 + $0x8] sm:$0xf]
        %v372 = vld [vmem:[%s260 + $0xc] sm:$0xf]
        %v373 = vld [vmem:[%s260 + $0x10] sm:$0xf]
        %v374 = vld [vmem:[%s260 + $0x14] sm:$0xf]
        %v375 = vld [vmem:[%s260 + $0x18] sm:$0xf]
        %v376 = vld [vmem:[%s260 + $0x1c] sm:$0xf]
        %v377 = vld [vmem:[%s260 + $0x20] sm:$0xf]
        %v378 = vld [vmem:[%s260 + $0x24] sm:$0xf]
        %v379 = vld [vmem:[%s260 + $0x28] sm:$0xf]
        %v380 = vld [vmem:[%s260 + $0x2c] sm:$0xf]
        %v381 = vld [vmem:[%s260 + $0x30] sm:$0xf]
        %v382 = vld [vmem:[%s260 + $0x34] sm:$0xf]
        %v383 = vld [vmem:[%s260 + $0x38] sm:$0xf]
        %v384 = vld [vmem:[%s260 + $0x3c] sm:$0xf]
        %v385 = vld [vmem:[%s293] sm:$0x1]
        %v387 = vlaneseq
        %v388 = vshrl.u32 %v387, 7
        %v389 = vsub.s32 0, %v388
        %v390 = vrot.slane %v385, %v389
        %v408 = vunpack.c.l.b16 %v369
        %v409 = vunpack.c.l.b16 %v370
        %v410 = vunpack.c.l.b16 %v371
        %v411 = vunpack.c.l.b16 %v372
        %v412 = vunpack.c.l.b16 %v373
        %v413 = vunpack.c.l.b16 %v374
        %v414 = vunpack.c.l.b16 %v375
        %v415 = vunpack.c.l.b16 %v376
        %v416 = vunpack.c.l.b16 %v377
        %v417 = vunpack.c.l.b16 %v378
        %v418 = vunpack.c.l.b16 %v379
        %v419 = vunpack.c.l.b16 %v380
        %v420 = vunpack.c.l.b16 %v381
        %v421 = vunpack.c.l.b16 %v382
        %v422 = vunpack.c.l.b16 %v383
        %v423 = vunpack.c.l.b16 %v384
        %v424 = vpack.c.b16 %v409, %v408
        %v425 = vpack.c.b16 %v411, %v410
        %v426 = vpack.c.b16 %v413, %v412
        %v427 = vpack.c.b16 %v415, %v414
        %v428 = vpack.c.b16 %v417, %v416
        %v429 = vpack.c.b16 %v419, %v418
        %v430 = vpack.c.b16 %v421, %v420
        %v431 = vpack.c.b16 %v423, %v422
        %440 = vmatprep.subr.bf16.mxu0 0
        %441 = vmatpush1.bf16.msra.mxu0 %v424
        %442 = vmatprep.subr.bf16.mxu0 0
        %443 = vmatpush1.bf16.msra.mxu0 %v425
        %444 = vmatprep.subr.bf16.mxu0 0
        %445 = vmatpush1.bf16.msra.mxu0 %v426
        %446 = vmatprep.subr.bf16.mxu0 0
        %447 = vmatpush1.bf16.msra.mxu0 %v427
        %448 = vmatprep.subr.bf16.mxu0 0
        %449 = vmatpush1.bf16.msra.mxu0 %v428
        %450 = vmatprep.subr.bf16.mxu0 0
        %451 = vmatpush1.bf16.msra.mxu0 %v429
        %452 = vmatprep.subr.bf16.mxu0 0
        %453 = vmatpush1.bf16.msra.mxu0 %v430
        %454 = vmatprep.subr.bf16.mxu0 0
        %455 = vmatpush1.bf16.msra.mxu0 %v431
        %456 = vmatprep.subr.bf16.mxu0 0
        %457 = vmatpush1.bf16.msra.mxu0 0
        %458 = vmatprep.subr.bf16.mxu0 0
        %459 = vmatpush1.bf16.msra.mxu0 0
        %460 = vmatprep.subr.bf16.mxu0 0
        %461 = vmatpush1.bf16.msra.mxu0 0
        %462 = vmatprep.subr.bf16.mxu0 0
        %463 = vmatpush1.bf16.msra.mxu0 0
        %464 = vmatprep.subr.bf16.mxu0 0
        %465 = vmatpush1.bf16.msra.mxu0 0
        %466 = vmatprep.subr.bf16.mxu0 0
        %467 = vmatpush1.bf16.msra.mxu0 0
        %468 = vmatprep.subr.bf16.mxu0 0
        %469 = vmatpush1.bf16.msra.mxu0 0
        %470 = vmatprep.subr.bf16.mxu0 0
        %471 = vmatpush1.bf16.msra.mxu0 0
        %472 = vmatprep.mubr.bf16.mxu0 0
        %473 = vmatmul.mubr.bf16.gmra.mrb[0].mxu0 %v367
        %v474 = vpop.f32.mrb[0].mxu0
        %v475 = vadd.f32 %v390, %v474
        %v476 = vpop.f32.mrb[0].mxu0
        %v477 = vpop.f32.mrb[0].mxu0
        %v478 = vadd.f32 %v390, %v477
        %v479 = vpop.f32.mrb[0].mxu0
        %480 = vmatprep.mubr.bf16.mxu0 0
        %481 = vmatmul.mubr.bf16.gmra.mrb[0].mxu0 %v368
        %v482 = vpop.f32.mrb[0].mxu0
        %v483 = vadd.f32 %v390, %v482
        %v484 = vpop.f32.mrb[0].mxu0
        %v485 = vpop.f32.mrb[0].mxu0
        %v486 = vadd.f32 %v390, %v485
        %v487 = vpop.f32.mrb[0].mxu0
        %488 = vdwg.mxu0
        %v489 = vpack.c.bf16 %v478, %v475
        %v490 = vpack.c.bf16 %v486, %v483
        %v493 = vunpack.c.l.b16 %v489
        %v494 = vunpack.c.h.b16 %v489
        %v495 = vunpack.c.l.b16 %v490
        %v496 = vunpack.c.h.b16 %v490
        %v497 = vpack.c.b16 %v493, %v493
        %v498 = vpack.c.b16 %v494, %v494
        %v499 = vpack.c.b16 %v495, %v495
        %v500 = vpack.c.b16 %v496, %v496
        %505 = vst [vmem:[%s289] sm:$0xf] %v497
        %506 = vst [vmem:[%s289 + $0x4] sm:$0xf] %v498
        %507 = vst [vmem:[%s289 + $0x8] sm:$0xf] %v499
        %508 = vst [vmem:[%s289 + $0xc] sm:$0xf] %v500
        %s509 = sand.u32 %s165, 1
        %s510 = scalar_lea.sflag [#allocation4], %s509
        %s511 = sand.u32 %s165, 1
        %s512 = smul.addr %s511, 16
        %s513 = scalar_lea.vmem [#allocation7], %s512
        // Predicated region
        $region49: #{tpu_custom_call.1} parent=39 // pred_check
          %p514 = pneg %p175
        $region50: #{tpu_custom_call.1} parent=39 // pred_check_branch
          %516 = sbr.rel (%p514) target = $region52
        $region51: #{tpu_custom_call.1} parent=39 // pred_region
          %s517 = smul.u32 4, %s27
          %s519 = ssub.s32 256, 256
          %520 = vsyncadd %s510, %s519
          %s521 = smul.addr %s517, 3
          %s522 = sadd.s32 %s28, %s521
          %s523 = smul.addr %s522, 64
          %s524 = scalar_lea.hbm %s5, %s523
          %s525 = sshll.u32 %s513, 4
          %s526 = int_to_ptr.vmem [resolvable:$true] %s525
          %531 = dma.vmem_to_hbm [thread:$0]  %s526, 256, %s524, %s510, 64, 192, 4
        $region52: #{tpu_custom_call.1} parent=39 // pred_fallthru
          _
      $region40: #{tpu_custom_call.1} parent=5 // pred_fallthru
        _
      %p532 = scmp.le.s32.totalorder 2, %s18
      // Predicated region
      $region53: #{tpu_custom_call.1} parent=5 // pred_check
        %p533 = pneg %p532
      $region54: #{tpu_custom_call.1} parent=5 // pred_check_branch
        %535 = sbr.rel (%p533) target = $region56
      $region55: #{tpu_custom_call.1} parent=5 // pred_region
        %s536 = ssub.s32 %s18, 2
        // Predicated region
        $region57: #{tpu_custom_call.1} parent=55 // pred_check
          %p537 = pneg %p181
        $region58: #{tpu_custom_call.1} parent=55 // pred_check_branch
          %539 = sbr.rel (%p537) target = $region60
        $region59: #{tpu_custom_call.1} parent=55 // pred_region
          %s540 = sand.u32 %s166, 1
          %s541 = scalar_lea.sflag [#allocation4], %s540
          %s542 = sand.u32 %s166, 1
          %s543 = smul.addr %s542, 16
          %s544 = scalar_lea.vmem [#allocation7], %s543
          %545 = dma.done %s541, 256
        $region60: #{tpu_custom_call.1} parent=55 // pred_fallthru
          _
      $region56: #{tpu_custom_call.1} parent=5 // pred_fallthru
        _
    $region6: #{tpu_custom_call.1} parent=1 // loop_footer
      %s22 = sadd.s32 1, %s18
    $region7: #{tpu_custom_call.1} parent=1 // loop_footer_branch
      %17 = sbr.rel target = $region3
    $region8: #{tpu_custom_call.1} parent=1 // loop_exit
      _
    %546 = vsyncpa [#allocation3], 1
    %s547 = scalar_lea.sflag [#allocation3], 1
    %548 = vsyncpa %s547, 1
    %549 = vsyncpa [#allocation6], 1
    %s550 = scalar_lea.sflag [#allocation6], 1
    %551 = vsyncpa %s550, 1
    %552 = vsyncpa [#allocation4], 1
    %s553 = scalar_lea.sflag [#allocation4], 1
    %554 = vsyncpa %s553, 1

</llo_original>
